<compile_context>
chip_gen: v5e
topology: v5e:2x2
jax: 0.10.0
libtpu: 0.0.40
codegen_flags: <defaults>
</compile_context>

<pallas_src>
import functools
import math

import jax
import jax.numpy as jnp
from jax.experimental import pallas as pl
from jax.experimental.pallas import tpu as pltpu

LOG_STD_MAX = 3.0
LOG_STD_MIN = -5.0
LOG_STD_SCALE = 0.5 * (LOG_STD_MAX - LOG_STD_MIN)   # 4.0
LOG_STD_OFFSET = LOG_STD_MIN + LOG_STD_SCALE        # -1.0
HIDDEN = 256


def actor_kernel(x_ref, w1_ref, b1_ref, w2_ref, b2_ref, wh_ref, bh_ref,
                 out_ref, *, action_dim):
    x = x_ref[...]                                                # (TB, S) f32
    # fc1 + relu  (bf16 MXU inputs, f32 accumulate, f32 elementwise)
    h1 = jnp.dot(x.astype(jnp.bfloat16), w1_ref[...],
                 preferred_element_type=jnp.float32) + b1_ref[...]
    h1 = jnp.maximum(h1, 0.0)
    # fc2 + relu
    h2 = jnp.dot(h1.astype(jnp.bfloat16), w2_ref[...],
                 preferred_element_type=jnp.float32) + b2_ref[...]
    h2 = jnp.maximum(h2, 0.0)
    # fused heads: lanes [0, A) = mean, lanes [A, 2A) = log_std, rest = pad
    head = jnp.dot(h2.astype(jnp.bfloat16), wh_ref[...],
                   preferred_element_type=jnp.float32) + bh_ref[...]
    log_std = LOG_STD_SCALE * jnp.tanh(head) + LOG_STD_OFFSET     # tanh -> EUP
    lane = jax.lax.broadcasted_iota(jnp.int32, head.shape, 1)
    out_ref[...] = jnp.where(lane >= action_dim, log_std, head)   # lane-dense store


def actor_forward(x, params, *, tile_b=256):
    """Full Actor.forward in a single Pallas kernel.

    x: (B, state_dim) float32
    returns: (mean, log_std), each (B, action_dim) float32
    """
    B, S = x.shape
    A = params["wm"].shape[1]
    # Lane-dense padded head width (mean in [0,A), log_std in [A,2A)).
    P = max(128, ((2 * A + 127) // 128) * 128)

    # bf16 MXU weights; biases stay f32.
    w1 = params["w1"].astype(jnp.bfloat16)
    w2 = params["w2"].astype(jnp.bfloat16)
    wh = jnp.zeros((HIDDEN, P), jnp.bfloat16)
    wh = wh.at[:, :A].set(params["wm"].astype(jnp.bfloat16))
    wh = wh.at[:, A:2 * A].set(params["wl"].astype(jnp.bfloat16))
    b1, b2 = params["b1"], params["b2"]
    bh = jnp.zeros((1, P), jnp.float32)
    bh = bh.at[:, :A].set(params["bm"])
    bh = bh.at[:, A:2 * A].set(params["bl"])

    # Batch tiling: TB rows per grid step, weights VMEM-resident across steps.
    TB = min(tile_b, ((B + 7) // 8) * 8)
    Bp = ((B + TB - 1) // TB) * TB
    if Bp != B:
        x = jnp.pad(x, ((0, Bp - B), (0, 0)))
    nb = Bp // TB

    const = lambda shape: pl.BlockSpec(shape, lambda i: (0, 0))
    out = pl.pallas_call(
        functools.partial(actor_kernel, action_dim=A),
        out_shape=jax.ShapeDtypeStruct((Bp, P), jnp.float32),
        grid=(nb,),
        in_specs=[
            pl.BlockSpec((TB, S), lambda i: (i, 0)),
            const((S, HIDDEN)), const((1, HIDDEN)),
            const((HIDDEN, HIDDEN)), const((1, HIDDEN)),
            const((HIDDEN, P)), const((1, P)),
        ],
        out_specs=pl.BlockSpec((TB, P), lambda i: (i, 0)),
        compiler_params=pltpu.CompilerParams(
            dimension_semantics=("parallel",)),   # shards batch over v7x's 2 TCs
    )(x, w1, b1, w2, b2, wh, bh)

    mean = out[:B, :A]
    log_std = out[:B, A:2 * A]
    return mean, log_std


def init_params(key, state_dim, action_dim):
    """Deterministic init mimicking PyTorch nn.Linear default (U[-1/sqrt(fan_in), +])."""
    def linear(k, fan_in, fan_out):
        kw, kb = jax.random.split(k)
        bound = 1.0 / math.sqrt(fan_in)
        w = jax.random.uniform(kw, (fan_in, fan_out), jnp.float32, -bound, bound)
        b = jax.random.uniform(kb, (1, fan_out), jnp.float32, -bound, bound)
        return w, b

    k1, k2, k3, k4 = jax.random.split(key, 4)
    w1, b1 = linear(k1, state_dim, HIDDEN)
    w2, b2 = linear(k2, HIDDEN, HIDDEN)
    wm, bm = linear(k3, HIDDEN, action_dim)
    wl, bl = linear(k4, HIDDEN, action_dim)
    return dict(w1=w1, b1=b1, w2=w2, b2=b2, wm=wm, bm=bm, wl=wl, bl=bl)


def actor_forward_ref(x, p):
    """Plain-JAX reference using the same bf16-at-the-MXU numerics as the kernel."""
    bf = jnp.bfloat16
    h1 = jnp.maximum(jnp.dot(x.astype(bf), p["w1"].astype(bf),
                             preferred_element_type=jnp.float32) + p["b1"], 0.0)
    h2 = jnp.maximum(jnp.dot(h1.astype(bf), p["w2"].astype(bf),
                             preferred_element_type=jnp.float32) + p["b2"], 0.0)
    mean = jnp.dot(h2.astype(bf), p["wm"].astype(bf),
                   preferred_element_type=jnp.float32) + p["bm"]
    z = jnp.dot(h2.astype(bf), p["wl"].astype(bf),
                preferred_element_type=jnp.float32) + p["bl"]
    log_std = LOG_STD_SCALE * jnp.tanh(z) + LOG_STD_OFFSET
    return mean, log_std


if __name__ == "__main__":
    key = jax.random.PRNGKey(0)
    kx, kp = jax.random.split(key)

    batch, state_dim, action_dim = 8, 16, 8
    x = jax.random.normal(kx, (batch, state_dim), jnp.float32)
    params = init_params(kp, state_dim, action_dim)

    mean, log_std = jax.jit(actor_forward)(x, params)
    jax.block_until_ready((mean, log_std))

    # sanity check against plain-JAX reference (same bf16 MXU numerics)
    mean_ref, log_std_ref = actor_forward_ref(x, params)
    assert mean.shape == (batch, action_dim) and log_std.shape == (batch, action_dim)
    assert jnp.allclose(mean, mean_ref, atol=5e-3, rtol=1e-3), "mean mismatch"
    assert jnp.allclose(log_std, log_std_ref, atol=5e-3, rtol=1e-3), "log_std mismatch"

    print("KERNEL_OK")
</pallas_src>

<mosaic_0001>
module attributes {stable_mosaic.version = 11 : i64} {
  func.func @actor_kernel(%arg0: i32, %arg1: memref<8x16xf32, #tpu.memory_space<vmem>>, %arg2: memref<16x256xbf16, #tpu.memory_space<vmem>>, %arg3: memref<1x256xf32, #tpu.memory_space<vmem>>, %arg4: memref<256x256xbf16, #tpu.memory_space<vmem>>, %arg5: memref<1x256xf32, #tpu.memory_space<vmem>>, %arg6: memref<256x128xbf16, #tpu.memory_space<vmem>>, %arg7: memref<1x128xf32, #tpu.memory_space<vmem>>, %arg8: memref<8x128xf32, #tpu.memory_space<vmem>>) attributes {dimension_semantics = [#tpu.dimension_semantics<parallel>], iteration_bounds = array<i64: 1>, scalar_prefetch = 0 : i64, scratch_operands = 0 : i64, tpu.core_type = #tpu.core_type<tc>, window_params = [{transform_indices = @transform_0, window_bounds = array<i64: 8, 16>}, {pipeline_mode = #tpu.pipeline_mode<synchronous>, transform_indices = @transform_1, window_bounds = array<i64: 16, 256>}, {pipeline_mode = #tpu.pipeline_mode<synchronous>, transform_indices = @transform_2, window_bounds = array<i64: 1, 256>}, {pipeline_mode = #tpu.pipeline_mode<synchronous>, transform_indices = @transform_3, window_bounds = array<i64: 256, 256>}, {pipeline_mode = #tpu.pipeline_mode<synchronous>, transform_indices = @transform_4, window_bounds = array<i64: 1, 256>}, {pipeline_mode = #tpu.pipeline_mode<synchronous>, transform_indices = @transform_5, window_bounds = array<i64: 256, 128>}, {pipeline_mode = #tpu.pipeline_mode<synchronous>, transform_indices = @transform_6, window_bounds = array<i64: 1, 128>}, {transform_indices = @transform_7, window_bounds = array<i64: 8, 128>}]} {
    %c0 = arith.constant 0 : index
    %c0_0 = arith.constant 0 : index
    %0 = vector.load %arg1[%c0, %c0_0] : memref<8x16xf32, #tpu.memory_space<vmem>>, vector<8x16xf32>
    %1 = arith.truncf %0 : vector<8x16xf32> to vector<8x16xbf16>
    %c0_1 = arith.constant 0 : index
    %c0_2 = arith.constant 0 : index
    %2 = vector.load %arg2[%c0_1, %c0_2] : memref<16x256xbf16, #tpu.memory_space<vmem>>, vector<16x256xbf16>
    %cst = arith.constant dense<0.000000e+00> : vector<8x256xf32>
    %3 = tpu.matmul %1, %2, %cst {dimension_numbers = #tpu.dot_dimension_numbers<[1], [0], [0], [1], [0, 0, 1, 1], [], []>} : vector<8x16xbf16>, vector<16x256xbf16>, vector<8x256xf32> -> vector<8x256xf32>
    %c0_3 = arith.constant 0 : index
    %c0_4 = arith.constant 0 : index
    %4 = vector.load %arg3[%c0_3, %c0_4] : memref<1x256xf32, #tpu.memory_space<vmem>>, vector<1x256xf32>
    %5 = vector.broadcast %4 : vector<1x256xf32> to vector<8x256xf32>
    %6 = arith.addf %3, %5 : vector<8x256xf32>
    %cst_5 = arith.constant 0.000000e+00 : f32
    %7 = vector.broadcast %cst_5 : f32 to vector<8x256xf32>
    %8 = arith.maximumf %6, %7 : vector<8x256xf32>
    %9 = arith.truncf %8 : vector<8x256xf32> to vector<8x256xbf16>
    %c0_6 = arith.constant 0 : index
    %c0_7 = arith.constant 0 : index
    %10 = vector.load %arg4[%c0_6, %c0_7] : memref<256x256xbf16, #tpu.memory_space<vmem>>, vector<256x256xbf16>
    %cst_8 = arith.constant dense<0.000000e+00> : vector<8x256xf32>
    %11 = tpu.matmul %9, %10, %cst_8 {dimension_numbers = #tpu.dot_dimension_numbers<[1], [0], [0], [1], [0, 0, 1, 1], [], []>} : vector<8x256xbf16>, vector<256x256xbf16>, vector<8x256xf32> -> vector<8x256xf32>
    %c0_9 = arith.constant 0 : index
    %c0_10 = arith.constant 0 : index
    %12 = vector.load %arg5[%c0_9, %c0_10] : memref<1x256xf32, #tpu.memory_space<vmem>>, vector<1x256xf32>
    %13 = vector.broadcast %12 : vector<1x256xf32> to vector<8x256xf32>
    %14 = arith.addf %11, %13 : vector<8x256xf32>
    %cst_11 = arith.constant 0.000000e+00 : f32
    %15 = vector.broadcast %cst_11 : f32 to vector<8x256xf32>
    %16 = arith.maximumf %14, %15 : vector<8x256xf32>
    %17 = arith.truncf %16 : vector<8x256xf32> to vector<8x256xbf16>
    %c0_12 = arith.constant 0 : index
    %c0_13 = arith.constant 0 : index
    %18 = vector.load %arg6[%c0_12, %c0_13] : memref<256x128xbf16, #tpu.memory_space<vmem>>, vector<256x128xbf16>
    %cst_14 = arith.constant dense<0.000000e+00> : vector<8x128xf32>
    %19 = tpu.matmul %17, %18, %cst_14 {dimension_numbers = #tpu.dot_dimension_numbers<[1], [0], [0], [1], [0, 0, 1, 1], [], []>} : vector<8x256xbf16>, vector<256x128xbf16>, vector<8x128xf32> -> vector<8x128xf32>
    %c0_15 = arith.constant 0 : index
    %c0_16 = arith.constant 0 : index
    %20 = vector.load %arg7[%c0_15, %c0_16] : memref<1x128xf32, #tpu.memory_space<vmem>>, vector<1x128xf32>
    %21 = vector.broadcast %20 : vector<1x128xf32> to vector<8x128xf32>
    %22 = arith.addf %19, %21 : vector<8x128xf32>
    %23 = math.tanh %22 : vector<8x128xf32>
    %cst_17 = arith.constant 4.000000e+00 : f32
    %24 = vector.broadcast %cst_17 : f32 to vector<8x128xf32>
    %25 = arith.mulf %24, %23 : vector<8x128xf32>
    %cst_18 = arith.constant -1.000000e+00 : f32
    %26 = vector.broadcast %cst_18 : f32 to vector<8x128xf32>
    %27 = arith.addf %25, %26 : vector<8x128xf32>
    %28 = tpu.iota {dimensions = array<i32: 1>} : vector<8x128xi32>
    %c8_i32 = arith.constant 8 : i32
    %29 = vector.broadcast %c8_i32 : i32 to vector<8x128xi32>
    %30 = arith.cmpi sge, %28, %29 : vector<8x128xi32>
    %31 = arith.select %30, %27, %22 : vector<8x128xi1>, vector<8x128xf32>
    %c0_19 = arith.constant 0 : index
    %c0_20 = arith.constant 0 : index
    %32 = vector.load %arg8[%c0_19, %c0_20] : memref<8x128xf32, #tpu.memory_space<vmem>>, vector<8x128xf32>
    tpu.vector_store %arg8[%c0_19, %c0_20], %31 {strides = array<i32>} : memref<8x128xf32, #tpu.memory_space<vmem>>, vector<8x128xf32>,
    return
  }
  func.func @transform_0(%arg0: i32) -> (i32, i32) {
    %c0_i32 = arith.constant 0 : i32
    %c0_i32_0 = arith.constant 0 : i32
    return %arg0, %c0_i32 : i32, i32
  }
  func.func @transform_1(%arg0: i32) -> (i32, i32) {
    %c0_i32 = arith.constant 0 : i32
    %c0_i32_0 = arith.constant 0 : i32
    %c0_i32_1 = arith.constant 0 : i32
    return %c0_i32, %c0_i32_0 : i32, i32
  }
  func.func @transform_2(%arg0: i32) -> (i32, i32) {
    %c0_i32 = arith.constant 0 : i32
    %c0_i32_0 = arith.constant 0 : i32
    %c0_i32_1 = arith.constant 0 : i32
    return %c0_i32, %c0_i32_0 : i32, i32
  }
  func.func @transform_3(%arg0: i32) -> (i32, i32) {
    %c0_i32 = arith.constant 0 : i32
    %c0_i32_0 = arith.constant 0 : i32
    %c0_i32_1 = arith.constant 0 : i32
    return %c0_i32, %c0_i32_0 : i32, i32
  }
  func.func @transform_4(%arg0: i32) -> (i32, i32) {
    %c0_i32 = arith.constant 0 : i32
    %c0_i32_0 = arith.constant 0 : i32
    %c0_i32_1 = arith.constant 0 : i32
    return %c0_i32, %c0_i32_0 : i32, i32
  }
  func.func @transform_5(%arg0: i32) -> (i32, i32) {
    %c0_i32 = arith.constant 0 : i32
    %c0_i32_0 = arith.constant 0 : i32
    %c0_i32_1 = arith.constant 0 : i32
    return %c0_i32, %c0_i32_0 : i32, i32
  }
  func.func @transform_6(%arg0: i32) -> (i32, i32) {
    %c0_i32 = arith.constant 0 : i32
    %c0_i32_0 = arith.constant 0 : i32
    %c0_i32_1 = arith.constant 0 : i32
    return %c0_i32, %c0_i32_0 : i32, i32
  }
  func.func @transform_7(%arg0: i32) -> (i32, i32) {
    %c0_i32 = arith.constant 0 : i32
    %c0_i32_0 = arith.constant 0 : i32
    return %arg0, %c0_i32 : i32, i32
  }
}

</mosaic_0001>

<llo_original>
// kernel: actor_forward.1
$region0: #{actor_forward.1}
  #allocation0 [shape = 'u32[]', space=smem, size = 0x4, offset = 0x4, fixed_abs, tag = 'smem constant byte address 0x4 - core index']
  #allocation1 [shape = 'u32[72,128]{1,0:T(1,128)}', space=vmem, size = 0x9000, scoped, tag = 'internal scratch']
  %s0 = inlined_call_operand.vmem [shape: f32[8,16], index: 0, kind: input, shape index: {}]
  %s1 = inlined_call_operand.vmem [shape: bf16[16,256], index: 1, kind: input, shape index: {}]
  %s2 = inlined_call_operand.vmem [shape: f32[1,256], index: 2, kind: input, shape index: {}]
  %s3 = inlined_call_operand.vmem [shape: bf16[256,256], index: 3, kind: input, shape index: {}]
  %s4 = inlined_call_operand.vmem [shape: f32[1,256], index: 4, kind: input, shape index: {}]
  %s5 = inlined_call_operand.vmem [shape: bf16[256,128], index: 5, kind: input, shape index: {}]
  %s6 = inlined_call_operand.vmem [shape: f32[1,128], index: 6, kind: input, shape index: {}]
  %s7 = inlined_call_operand.vmem [shape: f32[8,128], index: 7, kind: output, shape index: {}]
  %s8 = sld [smem:[#allocation0]]
  $region38: #{actor_forward.1} parent=0
    _
  %s10 = ssub.s32 1, %s8
  %s11 = scalar_select 0, %s10, %s8
  // Predicated region
  $region2: #{actor_forward.1} parent=0 // pred_check
    _
  $region3: #{actor_forward.1} parent=0 // pred_check_branch
    %13 = sbr.rel (0) target = $region5
  $region4: #{actor_forward.1} parent=0 // pred_region
    _
  $region5: #{actor_forward.1} parent=0 // pred_fallthru
    _
  // Predicated region
  $region6: #{actor_forward.1} parent=0 // pred_check
    _
  $region7: #{actor_forward.1} parent=0 // pred_check_branch
    %15 = sbr.rel (0) target = $region9
  $region8: #{actor_forward.1} parent=0 // pred_region
    _
  $region9: #{actor_forward.1} parent=0 // pred_fallthru
    _
  // Predicated region
  $region10: #{actor_forward.1} parent=0 // pred_check
    _
  $region11: #{actor_forward.1} parent=0 // pred_check_branch
    %17 = sbr.rel (0) target = $region13
  $region12: #{actor_forward.1} parent=0 // pred_region
    _
  $region13: #{actor_forward.1} parent=0 // pred_fallthru
    _
  // Predicated region
  $region14: #{actor_forward.1} parent=0 // pred_check
    _
  $region15: #{actor_forward.1} parent=0 // pred_check_branch
    %19 = sbr.rel (0) target = $region17
  $region16: #{actor_forward.1} parent=0 // pred_region
    _
  $region17: #{actor_forward.1} parent=0 // pred_fallthru
    _
  // Predicated region
  $region18: #{actor_forward.1} parent=0 // pred_check
    _
  $region19: #{actor_forward.1} parent=0 // pred_check_branch
    %21 = sbr.rel (0) target = $region21
  $region20: #{actor_forward.1} parent=0 // pred_region
    _
  $region21: #{actor_forward.1} parent=0 // pred_fallthru
    _
  // Predicated region
  $region22: #{actor_forward.1} parent=0 // pred_check
    _
  $region23: #{actor_forward.1} parent=0 // pred_check_branch
    %23 = sbr.rel (0) target = $region25
  $region24: #{actor_forward.1} parent=0 // pred_region
    _
  $region25: #{actor_forward.1} parent=0 // pred_fallthru
    _
  // Predicated region
  $region26: #{actor_forward.1} parent=0 // pred_check
    _
  $region27: #{actor_forward.1} parent=0 // pred_check_branch
    %25 = sbr.rel (0) target = $region29
  $region28: #{actor_forward.1} parent=0 // pred_region
    _
  $region29: #{actor_forward.1} parent=0 // pred_fallthru
    _
  %v27 = vld [vmem:[%s0] sm:$0xff]
  %v28 = vpack.c.bf16 %v27, %v27
  %v29 = vld [vmem:[%s1] sm:$0xff]
  %v30 = vld [vmem:[%s1 + $0x8] sm:$0xff]
  %v31 = vld [vmem:[%s2] sm:$0x3]
  %v33 = vperm.slane %v31, 0
  %v34 = vperm.slane %v31, 1
  %v39 = vunpack.c.l.b16 %v29
  %v40 = vunpack.c.h.b16 %v29
  %v41 = vunpack.c.l.b16 %v30
  %v42 = vunpack.c.h.b16 %v30
  %v43 = vpack.c.b16 %v41, %v39
  %v44 = vpack.c.b16 %v42, %v40
  %vm47 = vcmask 130048
  %v49 = vsel %vm47, %v28, 0
  %51 = vmatpush.bf16.msra.mxu0 0
  %52 = vmatpush.bf16.msra.mxu0 0
  %53 = vmatpush.bf16.msra.mxu0 0
  %54 = vmatpush.bf16.msra.mxu0 0
  %55 = vmatpush.bf16.msra.mxu0 0
  %56 = vmatpush.bf16.msra.mxu0 0
  %57 = vmatpush.bf16.msra.mxu0 0
  %58 = vmatpush.bf16.msra.mxu0 %v43
  %59 = vmatmul.bf16.gmra.mxu0 %v49
  %v60 = vpop.f32.mrf.mxu0
  %v61 = vadd.f32 %v33, %v60
  %v62 = vpop.f32.mrf.mxu0
  %63 = vdwg.mxu0
  %64 = vmatpush.bf16.msra.mxu0 0
  %65 = vmatpush.bf16.msra.mxu0 0
  %66 = vmatpush.bf16.msra.mxu0 0
  %67 = vmatpush.bf16.msra.mxu0 0
  %68 = vmatpush.bf16.msra.mxu0 0
  %69 = vmatpush.bf16.msra.mxu0 0
  %70 = vmatpush.bf16.msra.mxu0 0
  %71 = vmatpush.bf16.msra.mxu0 %v44
  %72 = vmatmul.bf16.gmra.mxu0 %v49
  %v73 = vpop.f32.mrf.mxu0
  %v74 = vadd.f32 %v34, %v73
  %v75 = vpop.f32.mrf.mxu0
  %76 = vdwg.mxu0
  %v77 = vmax.f32 %v61, 0.0
  %v78 = vmax.f32 %v74, 0.0
  %v79 = vpack.c.bf16 %v77, %v77
  %v80 = vpack.c.bf16 %v78, %v78
  %v81 = vld [vmem:[%s3] sm:$0xff]
  %v82 = vld [vmem:[%s3 + $0x8] sm:$0xff]
  %v83 = vld [vmem:[%s3 + $0x10] sm:$0xff]
  %v84 = vld [vmem:[%s3 + $0x18] sm:$0xff]
  %v85 = vld [vmem:[%s3 + $0x20] sm:$0xff]
  %v86 = vld [vmem:[%s3 + $0x28] sm:$0xff]
  %v87 = vld [vmem:[%s3 + $0x30] sm:$0xff]
  %v88 = vld [vmem:[%s3 + $0x38] sm:$0xff]
  %v89 = vld [vmem:[%s3 + $0x40] sm:$0xff]
  %v90 = vld [vmem:[%s3 + $0x48] sm:$0xff]
  %v91 = vld [vmem:[%s3 + $0x50] sm:$0xff]
  %v92 = vld [vmem:[%s3 + $0x58] sm:$0xff]
  %v93 = vld [vmem:[%s3 + $0x60] sm:$0xff]
  %v94 = vld [vmem:[%s3 + $0x68] sm:$0xff]
  %v95 = vld [vmem:[%s3 + $0x70] sm:$0xff]
  %v96 = vld [vmem:[%s3 + $0x78] sm:$0xff]
  %v97 = vld [vmem:[%s3 + $0x80] sm:$0xff]
  %v98 = vld [vmem:[%s3 + $0x88] sm:$0xff]
  %v99 = vld [vmem:[%s3 + $0x90] sm:$0xff]
  %v100 = vld [vmem:[%s3 + $0x98] sm:$0xff]
  %v101 = vld [vmem:[%s3 + $0xa0] sm:$0xff]
  %v102 = vld [vmem:[%s3 + $0xa8] sm:$0xff]
  %v103 = vld [vmem:[%s3 + $0xb0] sm:$0xff]
  %v104 = vld [vmem:[%s3 + $0xb8] sm:$0xff]
  %v105 = vld [vmem:[%s3 + $0xc0] sm:$0xff]
  %v106 = vld [vmem:[%s3 + $0xc8] sm:$0xff]
  %v107 = vld [vmem:[%s3 + $0xd0] sm:$0xff]
  %v108 = vld [vmem:[%s3 + $0xd8] sm:$0xff]
  %v109 = vld [vmem:[%s3 + $0xe0] sm:$0xff]
  %v110 = vld [vmem:[%s3 + $0xe8] sm:$0xff]
  %v111 = vld [vmem:[%s3 + $0xf0] sm:$0xff]
  %v112 = vld [vmem:[%s3 + $0xf8] sm:$0xff]
  %v113 = vld [vmem:[%s4] sm:$0x3]
  %v115 = vperm.slane %v113, 0
  %v116 = vperm.slane %v113, 1
  %v151 = vunpack.c.l.b16 %v81
  %v152 = vunpack.c.h.b16 %v81
  %v153 = vunpack.c.l.b16 %v82
  %v154 = vunpack.c.h.b16 %v82
  %v155 = vunpack.c.l.b16 %v83
  %v156 = vunpack.c.h.b16 %v83
  %v157 = vunpack.c.l.b16 %v84
  %v158 = vunpack.c.h.b16 %v84
  %v159 = vunpack.c.l.b16 %v85
  %v160 = vunpack.c.h.b16 %v85
  %v161 = vunpack.c.l.b16 %v86
  %v162 = vunpack.c.h.b16 %v86
  %v163 = vunpack.c.l.b16 %v87
  %v164 = vunpack.c.h.b16 %v87
  %v165 = vunpack.c.l.b16 %v88
  %v166 = vunpack.c.h.b16 %v88
  %v167 = vunpack.c.l.b16 %v89
  %v168 = vunpack.c.h.b16 %v89
  %v169 = vunpack.c.l.b16 %v90
  %v170 = vunpack.c.h.b16 %v90
  %v171 = vunpack.c.l.b16 %v91
  %v172 = vunpack.c.h.b16 %v91
  %v173 = vunpack.c.l.b16 %v92
  %v174 = vunpack.c.h.b16 %v92
  %v175 = vunpack.c.l.b16 %v93
  %v176 = vunpack.c.h.b16 %v93
  %v177 = vunpack.c.l.b16 %v94
  %v178 = vunpack.c.h.b16 %v94
  %v179 = vunpack.c.l.b16 %v95
  %v180 = vunpack.c.h.b16 %v95
  %v181 = vunpack.c.l.b16 %v96
  %v182 = vunpack.c.h.b16 %v96
  %v183 = vunpack.c.l.b16 %v97
  %v184 = vunpack.c.h.b16 %v97
  %v185 = vunpack.c.l.b16 %v98
  %v186 = vunpack.c.h.b16 %v98
  %v187 = vunpack.c.l.b16 %v99
  %v188 = vunpack.c.h.b16 %v99
  %v189 = vunpack.c.l.b16 %v100
  %v190 = vunpack.c.h.b16 %v100
  %v191 = vunpack.c.l.b16 %v101
  %v192 = vunpack.c.h.b16 %v101
  %v193 = vunpack.c.l.b16 %v102
  %v194 = vunpack.c.h.b16 %v102
  %v195 = vunpack.c.l.b16 %v103
  %v196 = vunpack.c.h.b16 %v103
  %v197 = vunpack.c.l.b16 %v104
  %v198 = vunpack.c.h.b16 %v104
  %v199 = vunpack.c.l.b16 %v105
  %v200 = vunpack.c.h.b16 %v105
  %v201 = vunpack.c.l.b16 %v106
  %v202 = vunpack.c.h.b16 %v106
  %v203 = vunpack.c.l.b16 %v107
  %v204 = vunpack.c.h.b16 %v107
  %v205 = vunpack.c.l.b16 %v108
  %v206 = vunpack.c.h.b16 %v108
  %v207 = vunpack.c.l.b16 %v109
  %v208 = vunpack.c.h.b16 %v109
  %v209 = vunpack.c.l.b16 %v110
  %v210 = vunpack.c.h.b16 %v110
  %v211 = vunpack.c.l.b16 %v111
  %v212 = vunpack.c.h.b16 %v111
  %v213 = vunpack.c.l.b16 %v112
  %v214 = vunpack.c.h.b16 %v112
  %v215 = vpack.c.b16 %v153, %v151
  %v216 = vpack.c.b16 %v154, %v152
  %v217 = vpack.c.b16 %v157, %v155
  %v218 = vpack.c.b16 %v158, %v156
  %v219 = vpack.c.b16 %v161, %v159
  %v220 = vpack.c.b16 %v162, %v160
  %v221 = vpack.c.b16 %v165, %v163
  %v222 = vpack.c.b16 %v166, %v164
  %v223 = vpack.c.b16 %v169, %v167
  %v224 = vpack.c.b16 %v170, %v168
  %v225 = vpack.c.b16 %v173, %v171
  %v226 = vpack.c.b16 %v174, %v172
  %v227 = vpack.c.b16 %v177, %v175
  %v228 = vpack.c.b16 %v178, %v176
  %v229 = vpack.c.b16 %v181, %v179
  %v230 = vpack.c.b16 %v182, %v180
  %v231 = vpack.c.b16 %v185, %v183
  %v232 = vpack.c.b16 %v186, %v184
  %v233 = vpack.c.b16 %v189, %v187
  %v234 = vpack.c.b16 %v190, %v188
  %v235 = vpack.c.b16 %v193, %v191
  %v236 = vpack.c.b16 %v194, %v192
  %v237 = vpack.c.b16 %v197, %v195
  %v238 = vpack.c.b16 %v198, %v196
  %v239 = vpack.c.b16 %v201, %v199
  %v240 = vpack.c.b16 %v202, %v200
  %v241 = vpack.c.b16 %v205, %v203
  %v242 = vpack.c.b16 %v206, %v204
  %v243 = vpack.c.b16 %v209, %v207
  %v244 = vpack.c.b16 %v210, %v208
  %v245 = vpack.c.b16 %v213, %v211
  %v246 = vpack.c.b16 %v214, %v212
  %279 = vmatpush.bf16.msra.mxu0 %v229
  %280 = vmatpush.bf16.msra.mxu0 %v227
  %281 = vmatpush.bf16.msra.mxu0 %v225
  %282 = vmatpush.bf16.msra.mxu0 %v223
  %283 = vmatpush.bf16.msra.mxu0 %v221
  %284 = vmatpush.bf16.msra.mxu0 %v219
  %285 = vmatpush.bf16.msra.mxu0 %v217
  %286 = vmatpush.bf16.msra.mxu0 %v215
  %287 = vmatmul.bf16.gmra.mxu0 %v79
  %v288 = vpop.f32.mrf.mxu0
  %v289 = vadd.f32 %v115, %v288
  %v290 = vpop.f32.mrf.mxu0
  %291 = vdwg.mxu0
  %292 = vmatpush.bf16.msra.mxu0 %v245
  %293 = vmatpush.bf16.msra.mxu0 %v243
  %294 = vmatpush.bf16.msra.mxu0 %v241
  %295 = vmatpush.bf16.msra.mxu0 %v239
  %296 = vmatpush.bf16.msra.mxu0 %v237
  %297 = vmatpush.bf16.msra.mxu0 %v235
  %298 = vmatpush.bf16.msra.mxu0 %v233
  %299 = vmatpush.bf16.msra.mxu0 %v231
  %300 = vmatmul.bf16.gmra.mxu0 %v80
  %v301 = vpop.f32.mrf.mxu0
  %v302 = vadd.f32 %v289, %v301
  %v303 = vpop.f32.mrf.mxu0
  %304 = vdwg.mxu0
  %305 = vmatpush.bf16.msra.mxu0 %v230
  %306 = vmatpush.bf16.msra.mxu0 %v228
  %307 = vmatpush.bf16.msra.mxu0 %v226
  %308 = vmatpush.bf16.msra.mxu0 %v224
  %309 = vmatpush.bf16.msra.mxu0 %v222
  %310 = vmatpush.bf16.msra.mxu0 %v220
  %311 = vmatpush.bf16.msra.mxu0 %v218
  %312 = vmatpush.bf16.msra.mxu0 %v216
  %313 = vmatmul.bf16.gmra.mxu0 %v79
  %v314 = vpop.f32.mrf.mxu0
  %v315 = vadd.f32 %v116, %v314
  %v316 = vpop.f32.mrf.mxu0
  %317 = vdwg.mxu0
  %318 = vmatpush.bf16.msra.mxu0 %v246
  %319 = vmatpush.bf16.msra.mxu0 %v244
  %320 = vmatpush.bf16.msra.mxu0 %v242
  %321 = vmatpush.bf16.msra.mxu0 %v240
  %322 = vmatpush.bf16.msra.mxu0 %v238
  %323 = vmatpush.bf16.msra.mxu0 %v236
  %324 = vmatpush.bf16.msra.mxu0 %v234
  %325 = vmatpush.bf16.msra.mxu0 %v232
  %326 = vmatmul.bf16.gmra.mxu0 %v80
  %v327 = vpop.f32.mrf.mxu0
  %v328 = vadd.f32 %v315, %v327
  %v329 = vpop.f32.mrf.mxu0
  %330 = vdwg.mxu0
  %v331 = vmax.f32 %v302, 0.0
  %v332 = vmax.f32 %v328, 0.0
  %v333 = vpack.c.bf16 %v331, %v331
  %v334 = vpack.c.bf16 %v332, %v332
  %v335 = vld [vmem:[%s5] sm:$0xf]
  %v336 = vld [vmem:[%s5 + $0x4] sm:$0xf]
  %v337 = vld [vmem:[%s5 + $0x8] sm:$0xf]
  %v338 = vld [vmem:[%s5 + $0xc] sm:$0xf]
  %v339 = vld [vmem:[%s5 + $0x10] sm:$0xf]
  %v340 = vld [vmem:[%s5 + $0x14] sm:$0xf]
  %v341 = vld [vmem:[%s5 + $0x18] sm:$0xf]
  %v342 = vld [vmem:[%s5 + $0x1c] sm:$0xf]
  %v343 = vld [vmem:[%s5 + $0x20] sm:$0xf]
  %v344 = vld [vmem:[%s5 + $0x24] sm:$0xf]
  %v345 = vld [vmem:[%s5 + $0x28] sm:$0xf]
  %v346 = vld [vmem:[%s5 + $0x2c] sm:$0xf]
  %v347 = vld [vmem:[%s5 + $0x30] sm:$0xf]
  %v348 = vld [vmem:[%s5 + $0x34] sm:$0xf]
  %v349 = vld [vmem:[%s5 + $0x38] sm:$0xf]
  %v350 = vld [vmem:[%s5 + $0x3c] sm:$0xf]
  %v351 = vld [vmem:[%s5 + $0x40] sm:$0xf]
  %v352 = vld [vmem:[%s5 + $0x44] sm:$0xf]
  %v353 = vld [vmem:[%s5 + $0x48] sm:$0xf]
  %v354 = vld [vmem:[%s5 + $0x4c] sm:$0xf]
  %v355 = vld [vmem:[%s5 + $0x50] sm:$0xf]
  %v356 = vld [vmem:[%s5 + $0x54] sm:$0xf]
  %v357 = vld [vmem:[%s5 + $0x58] sm:$0xf]
  %v358 = vld [vmem:[%s5 + $0x5c] sm:$0xf]
  %v359 = vld [vmem:[%s5 + $0x60] sm:$0xf]
  %v360 = vld [vmem:[%s5 + $0x64] sm:$0xf]
  %v361 = vld [vmem:[%s5 + $0x68] sm:$0xf]
  %v362 = vld [vmem:[%s5 + $0x6c] sm:$0xf]
  %v363 = vld [vmem:[%s5 + $0x70] sm:$0xf]
  %v364 = vld [vmem:[%s5 + $0x74] sm:$0xf]
  %v365 = vld [vmem:[%s5 + $0x78] sm:$0xf]
  %v366 = vld [vmem:[%s5 + $0x7c] sm:$0xf]
  %v367 = vld [vmem:[%s6] sm:$0x1]
  %v369 = vperm.slane %v367, 0
  %v403 = vunpack.c.l.b16 %v335
  %v404 = vunpack.c.l.b16 %v336
  %v405 = vunpack.c.l.b16 %v337
  %v406 = vunpack.c.l.b16 %v338
  %v407 = vunpack.c.l.b16 %v339
  %v408 = vunpack.c.l.b16 %v340
  %v409 = vunpack.c.l.b16 %v341
  %v410 = vunpack.c.l.b16 %v342
  %v411 = vunpack.c.l.b16 %v343
  %v412 = vunpack.c.l.b16 %v344
  %v413 = vunpack.c.l.b16 %v345
  %v414 = vunpack.c.l.b16 %v346
  %v415 = vunpack.c.l.b16 %v347
  %v416 = vunpack.c.l.b16 %v348
  %v417 = vunpack.c.l.b16 %v349
  %v418 = vunpack.c.l.b16 %v350
  %v419 = vunpack.c.l.b16 %v351
  %v420 = vunpack.c.l.b16 %v352
  %v421 = vunpack.c.l.b16 %v353
  %v422 = vunpack.c.l.b16 %v354
  %v423 = vunpack.c.l.b16 %v355
  %v424 = vunpack.c.l.b16 %v356
  %v425 = vunpack.c.l.b16 %v357
  %v426 = vunpack.c.l.b16 %v358
  %v427 = vunpack.c.l.b16 %v359
  %v428 = vunpack.c.l.b16 %v360
  %v429 = vunpack.c.l.b16 %v361
  %v430 = vunpack.c.l.b16 %v362
  %v431 = vunpack.c.l.b16 %v363
  %v432 = vunpack.c.l.b16 %v364
  %v433 = vunpack.c.l.b16 %v365
  %v434 = vunpack.c.l.b16 %v366
  %v435 = vpack.c.b16 %v404, %v403
  %v436 = vpack.c.b16 %v406, %v405
  %v437 = vpack.c.b16 %v408, %v407
  %v438 = vpack.c.b16 %v410, %v409
  %v439 = vpack.c.b16 %v412, %v411
  %v440 = vpack.c.b16 %v414, %v413
  %v441 = vpack.c.b16 %v416, %v415
  %v442 = vpack.c.b16 %v418, %v417
  %v443 = vpack.c.b16 %v420, %v419
  %v444 = vpack.c.b16 %v422, %v421
  %v445 = vpack.c.b16 %v424, %v423
  %v446 = vpack.c.b16 %v426, %v425
  %v447 = vpack.c.b16 %v428, %v427
  %v448 = vpack.c.b16 %v430, %v429
  %v449 = vpack.c.b16 %v432, %v431
  %v450 = vpack.c.b16 %v434, %v433
  %467 = vmatpush.bf16.msra.mxu0 %v442
  %468 = vmatpush.bf16.msra.mxu0 %v441
  %469 = vmatpush.bf16.msra.mxu0 %v440
  %470 = vmatpush.bf16.msra.mxu0 %v439
  %471 = vmatpush.bf16.msra.mxu0 %v438
  %472 = vmatpush.bf16.msra.mxu0 %v437
  %473 = vmatpush.bf16.msra.mxu0 %v436
  %474 = vmatpush.bf16.msra.mxu0 %v435
  %475 = vmatmul.bf16.gmra.mxu0 %v333
  %v476 = vpop.f32.mrf.mxu0
  %v477 = vadd.f32 %v369, %v476
  %v478 = vpop.f32.mrf.mxu0
  %479 = vdwg.mxu0
  %480 = vmatpush.bf16.msra.mxu0 %v450
  %481 = vmatpush.bf16.msra.mxu0 %v449
  %482 = vmatpush.bf16.msra.mxu0 %v448
  %483 = vmatpush.bf16.msra.mxu0 %v447
  %484 = vmatpush.bf16.msra.mxu0 %v446
  %485 = vmatpush.bf16.msra.mxu0 %v445
  %486 = vmatpush.bf16.msra.mxu0 %v444
  %487 = vmatpush.bf16.msra.mxu0 %v443
  %488 = vmatmul.bf16.gmra.mxu0 %v334
  %v489 = vpop.f32.mrf.mxu0
  %v490 = vadd.f32 %v477, %v489
  %v491 = vpop.f32.mrf.mxu0
  %492 = vdwg.mxu0
  %v493 = vtanh.pop %v490
  %v494 = vmul.f32 %v493, 4.0
  %v495 = vadd.f32 %v494, -1.0
  %v496 = vlaneseq
  %v497 = vand.u32 %v496, 127
  %vm498 = vcmp.ge.s32.totalorder %v497, 8
  %v499 = vsel %vm498, %v495, %v490
  %500 = vst [vmem:[%s7] sm:$0xff] %v499
  // Predicated region
  $region30: #{actor_forward.1} parent=0 // pred_check
    _
  $region31: #{actor_forward.1} parent=0 // pred_check_branch
    %502 = sbr.rel (0) target = $region33
  $region32: #{actor_forward.1} parent=0 // pred_region
    _
  $region33: #{actor_forward.1} parent=0 // pred_fallthru
    _
  // Predicated region
  $region34: #{actor_forward.1} parent=0 // pred_check
    _
  $region35: #{actor_forward.1} parent=0 // pred_check_branch
    %504 = sbr.rel (0) target = $region37
  $region36: #{actor_forward.1} parent=0 // pred_region
    _
  $region37: #{actor_forward.1} parent=0 // pred_fallthru
    _

</llo_original>
